<compile_context>
chip_gen: v7x
topology: tpu7x:2x2x1
jax: 0.10.0
libtpu: 0.0.40
codegen_flags: <defaults>
</compile_context>

<pallas_src>
import jax
import jax.numpy as jnp
from jax.experimental import pallas as pl
from jax.experimental.pallas import tpu as pltpu


def _round_up(x, m):
    return ((x + m - 1) // m) * m


def nnbl_kernel(x_ref, w1_ref, b1_ref, w2_ref, b2_ref, w3_ref, b3_ref, o_ref):
    # nn1 + Swish (bf16 operands on the MXU, f32 accumulation / activation)
    x = x_ref[...]
    h = jnp.dot(x, w1_ref[...], preferred_element_type=jnp.float32) + b1_ref[...]
    h = h * jax.nn.sigmoid(h)
    # nn2 + Swish
    h = jnp.dot(h.astype(w2_ref.dtype), w2_ref[...],
                preferred_element_type=jnp.float32) + b2_ref[...]
    h = h * jax.nn.sigmoid(h)
    # nn3 (no activation)
    o_ref[...] = (jnp.dot(h.astype(w3_ref.dtype), w3_ref[...],
                          preferred_element_type=jnp.float32)
                  + b3_ref[...]).astype(o_ref.dtype)


def prepare_params(params, compute_dtype=jnp.bfloat16):
    """One-time prep: transpose to (in, out), zero-pad feature dims to
    multiples of 128, cast weights to bf16.  Do this at init time, NOT per
    forward call (avoids per-call transpose/pad HBM traffic)."""
    planes = params["w1"].shape[0]      # nn1: (planes, planes)
    outplanes = params["w3"].shape[0]   # nn3: (outplanes, outplanes)
    P = _round_up(planes, 128)
    O = _round_up(outplanes, 128)

    def pad_wt(w, n_in, n_out, N_in, N_out):
        wt = w.T  # PyTorch weight is (out, in) -> (in, out)
        return jnp.pad(wt, ((0, N_in - n_in), (0, N_out - n_out))).astype(compute_dtype)

    def pad_b(b, n, N):
        return jnp.pad(b, (0, N - n)).reshape(1, N).astype(jnp.float32)

    return {
        "planes": planes, "outplanes": outplanes, "P": P, "O": O,
        "w1t": pad_wt(params["w1"], planes, planes, P, P),
        "w2t": pad_wt(params["w2"], planes, outplanes, P, O),
        "w3t": pad_wt(params["w3"], outplanes, outplanes, O, O),
        "b1": pad_b(params["b1"], planes, P),
        "b2": pad_b(params["b2"], outplanes, O),
        "b3": pad_b(params["b3"], outplanes, O),
    }


def nnbl_forward(x, prepped, *, block_batch=None):
    """x: (B, planes) float32.  prepped: output of prepare_params()."""
    B, in_features = x.shape
    planes, outplanes = prepped["planes"], prepped["outplanes"]
    P, O = prepped["P"], prepped["O"]
    assert in_features == planes
    compute_dtype = prepped["w1t"].dtype
    itemsize = jnp.dtype(compute_dtype).itemsize

    # --- pick the batch tile: big (fills MXU rows, amortizes ~0.35us/step),
    #     multiple of 8 sublanes, but keep >=2 grid steps for v7x megacore.
    B8 = _round_up(B, 8)
    if block_batch is None:
        block_batch = min(512, B8)
        if B8 >= 16 and B8 // block_batch < 2:
            block_batch = max(8, _round_up(B8 // 2, 8))
    block_batch = max(8, _round_up(block_batch, 8))
    B_pad = _round_up(B, block_batch)
    grid = (B_pad // block_batch,)

    # Pad batch rows and feature lanes with zeros; cast input to bf16.
    x_p = jnp.pad(x, ((0, B_pad - B), (0, P - planes))).astype(compute_dtype)

    # --- explicit VMEM budget (bytes): weights/biases + double-buffered tiles.
    weight_bytes = (P * P + P * O + O * O) * itemsize + (P + 2 * O) * 4
    tile_bytes = 2 * (block_batch * P * itemsize + block_batch * O * 4)
    vmem_limit = int(min(48 << 20, max(2 * (weight_bytes + tile_bytes), 8 << 20)))

    # --- advisory cost estimate so XLA schedules neighbors around the kernel.
    flops = 2 * B_pad * (P * P + P * O + O * O)
    bytes_accessed = int(B_pad * P * itemsize + weight_bytes + B_pad * O * 4)
    cost = pl.CostEstimate(flops=int(flops),
                           transcendentals=int(B_pad * (P + O)),
                           bytes_accessed=bytes_accessed)

    const2d = lambda shape: pl.BlockSpec(shape, lambda i: (0, 0))

    out_p = pl.pallas_call(
        nnbl_kernel,
        out_shape=jax.ShapeDtypeStruct((B_pad, O), jnp.float32),
        grid_spec=pltpu.PrefetchScalarGridSpec(
            num_scalar_prefetch=0,
            grid=grid,
            in_specs=[
                pl.BlockSpec((block_batch, P), lambda i: (i, 0)),  # x tile
                const2d((P, P)),   # w1.T (padded, bf16)
                const2d((1, P)),   # b1   (padded, f32)
                const2d((P, O)),   # w2.T
                const2d((1, O)),   # b2
                const2d((O, O)),   # w3.T
                const2d((1, O)),   # b3
            ],
            out_specs=pl.BlockSpec((block_batch, O), lambda i: (i, 0)),
        ),
        compiler_params=pltpu.CompilerParams(
            dimension_semantics=("parallel",),
            vmem_limit_bytes=vmem_limit),
        cost_estimate=cost,
    )(x_p, prepped["w1t"], prepped["b1"], prepped["w2t"], prepped["b2"],
      prepped["w3t"], prepped["b3"])

    # Slice off batch / lane padding.
    return out_p[:B, :outplanes]


def init_params(key, planes, outplanes):
    """Deterministic synthetic init (Kaiming-uniform-ish scaling like nn.Linear)."""
    ks = jax.random.split(key, 6)
    def lin(kw, kb, fan_in, fan_out):
        bound = 1.0 / jnp.sqrt(fan_in)
        w = jax.random.uniform(kw, (fan_out, fan_in), jnp.float32, -bound, bound)
        b = jax.random.uniform(kb, (fan_out,), jnp.float32, -bound, bound)
        return w, b
    w1, b1 = lin(ks[0], ks[1], planes, planes)
    w2, b2 = lin(ks[2], ks[3], planes, outplanes)
    w3, b3 = lin(ks[4], ks[5], outplanes, outplanes)
    return {"w1": w1, "b1": b1, "w2": w2, "b2": b2, "w3": w3, "b3": b3}


def nnbl_reference(x, p):
    def swish(v):
        return v * jax.nn.sigmoid(v)
    h = swish(x @ p["w1"].T + p["b1"])
    h = swish(h @ p["w2"].T + p["b2"])
    return h @ p["w3"].T + p["b3"]


if __name__ == "__main__":
    planes, outplanes, batch = 32, 16, 16
    key = jax.random.PRNGKey(0)
    kx, kp = jax.random.split(key)
    x = jax.random.normal(kx, (batch, planes), jnp.float32)
    params = init_params(kp, planes, outplanes)

    prepped = prepare_params(params)          # one-time transpose + pad + bf16
    out = jax.block_until_ready(nnbl_forward(x, prepped))

    ref = nnbl_reference(x, params)           # f32 reference
    assert out.shape == (batch, outplanes)
    # bf16 matmul operands -> loosened tolerance vs the f32 reference.
    assert jnp.allclose(out, ref, atol=3e-2, rtol=3e-2), (
        f"mismatch vs reference (max abs err {jnp.max(jnp.abs(out - ref))})")
    print("KERNEL_OK")
</pallas_src>

<mosaic_0001>
module attributes {stable_mosaic.version = 11 : i64} {
  func.func @nnbl_kernel(%arg0: i32, %arg1: memref<8x128xbf16, #tpu.memory_space<vmem>>, %arg2: memref<128x128xbf16, #tpu.memory_space<vmem>>, %arg3: memref<1x128xf32, #tpu.memory_space<vmem>>, %arg4: memref<128x128xbf16, #tpu.memory_space<vmem>>, %arg5: memref<1x128xf32, #tpu.memory_space<vmem>>, %arg6: memref<128x128xbf16, #tpu.memory_space<vmem>>, %arg7: memref<1x128xf32, #tpu.memory_space<vmem>>, %arg8: memref<8x128xf32, #tpu.memory_space<vmem>>) attributes {dimension_semantics = [#tpu.dimension_semantics<parallel>], iteration_bounds = array<i64: 2>, scalar_prefetch = 0 : i64, scratch_operands = 0 : i64, tpu.core_type = #tpu.core_type<tc>, window_params = [{transform_indices = @transform_0, window_bounds = array<i64: 8, 128>}, {pipeline_mode = #tpu.pipeline_mode<synchronous>, transform_indices = @transform_1, window_bounds = array<i64: 128, 128>}, {pipeline_mode = #tpu.pipeline_mode<synchronous>, transform_indices = @transform_2, window_bounds = array<i64: 1, 128>}, {pipeline_mode = #tpu.pipeline_mode<synchronous>, transform_indices = @transform_3, window_bounds = array<i64: 128, 128>}, {pipeline_mode = #tpu.pipeline_mode<synchronous>, transform_indices = @transform_4, window_bounds = array<i64: 1, 128>}, {pipeline_mode = #tpu.pipeline_mode<synchronous>, transform_indices = @transform_5, window_bounds = array<i64: 128, 128>}, {pipeline_mode = #tpu.pipeline_mode<synchronous>, transform_indices = @transform_6, window_bounds = array<i64: 1, 128>}, {transform_indices = @transform_7, window_bounds = array<i64: 8, 128>}]} {
    %c0 = arith.constant 0 : index
    %c0_0 = arith.constant 0 : index
    %0 = vector.load %arg1[%c0, %c0_0] : memref<8x128xbf16, #tpu.memory_space<vmem>>, vector<8x128xbf16>
    %c0_1 = arith.constant 0 : index
    %c0_2 = arith.constant 0 : index
    %1 = vector.load %arg2[%c0_1, %c0_2] : memref<128x128xbf16, #tpu.memory_space<vmem>>, vector<128x128xbf16>
    %cst = arith.constant dense<0.000000e+00> : vector<8x128xf32>
    %2 = tpu.matmul %0, %1, %cst {dimension_numbers = #tpu.dot_dimension_numbers<[1], [0], [0], [1], [0, 0, 1, 1], [], []>} : vector<8x128xbf16>, vector<128x128xbf16>, vector<8x128xf32> -> vector<8x128xf32>
    %c0_3 = arith.constant 0 : index
    %c0_4 = arith.constant 0 : index
    %3 = vector.load %arg3[%c0_3, %c0_4] : memref<1x128xf32, #tpu.memory_space<vmem>>, vector<1x128xf32>
    %4 = vector.broadcast %3 : vector<1x128xf32> to vector<8x128xf32>
    %5 = arith.addf %2, %4 : vector<8x128xf32>
    %6 = arith.negf %5 : vector<8x128xf32>
    %7 = math.exp %6 : vector<8x128xf32>
    %cst_5 = arith.constant 1.000000e+00 : f32
    %8 = vector.broadcast %cst_5 : f32 to vector<8x128xf32>
    %9 = arith.addf %8, %7 : vector<8x128xf32>
    %10 = arith.divf %8, %9 : vector<8x128xf32>
    %11 = arith.mulf %5, %10 : vector<8x128xf32>
    %12 = arith.truncf %11 : vector<8x128xf32> to vector<8x128xbf16>
    %c0_6 = arith.constant 0 : index
    %c0_7 = arith.constant 0 : index
    %13 = vector.load %arg4[%c0_6, %c0_7] : memref<128x128xbf16, #tpu.memory_space<vmem>>, vector<128x128xbf16>
    %cst_8 = arith.constant dense<0.000000e+00> : vector<8x128xf32>
    %14 = tpu.matmul %12, %13, %cst_8 {dimension_numbers = #tpu.dot_dimension_numbers<[1], [0], [0], [1], [0, 0, 1, 1], [], []>} : vector<8x128xbf16>, vector<128x128xbf16>, vector<8x128xf32> -> vector<8x128xf32>
    %c0_9 = arith.constant 0 : index
    %c0_10 = arith.constant 0 : index
    %15 = vector.load %arg5[%c0_9, %c0_10] : memref<1x128xf32, #tpu.memory_space<vmem>>, vector<1x128xf32>
    %16 = vector.broadcast %15 : vector<1x128xf32> to vector<8x128xf32>
    %17 = arith.addf %14, %16 : vector<8x128xf32>
    %18 = arith.negf %17 : vector<8x128xf32>
    %19 = math.exp %18 : vector<8x128xf32>
    %cst_11 = arith.constant 1.000000e+00 : f32
    %20 = vector.broadcast %cst_11 : f32 to vector<8x128xf32>
    %21 = arith.addf %20, %19 : vector<8x128xf32>
    %22 = arith.divf %20, %21 : vector<8x128xf32>
    %23 = arith.mulf %17, %22 : vector<8x128xf32>
    %24 = arith.truncf %23 : vector<8x128xf32> to vector<8x128xbf16>
    %c0_12 = arith.constant 0 : index
    %c0_13 = arith.constant 0 : index
    %25 = vector.load %arg6[%c0_12, %c0_13] : memref<128x128xbf16, #tpu.memory_space<vmem>>, vector<128x128xbf16>
    %cst_14 = arith.constant dense<0.000000e+00> : vector<8x128xf32>
    %26 = tpu.matmul %24, %25, %cst_14 {dimension_numbers = #tpu.dot_dimension_numbers<[1], [0], [0], [1], [0, 0, 1, 1], [], []>} : vector<8x128xbf16>, vector<128x128xbf16>, vector<8x128xf32> -> vector<8x128xf32>
    %c0_15 = arith.constant 0 : index
    %c0_16 = arith.constant 0 : index
    %27 = vector.load %arg7[%c0_15, %c0_16] : memref<1x128xf32, #tpu.memory_space<vmem>>, vector<1x128xf32>
    %28 = vector.broadcast %27 : vector<1x128xf32> to vector<8x128xf32>
    %29 = arith.addf %26, %28 : vector<8x128xf32>
    %c0_17 = arith.constant 0 : index
    %c0_18 = arith.constant 0 : index
    %30 = vector.load %arg8[%c0_17, %c0_18] : memref<8x128xf32, #tpu.memory_space<vmem>>, vector<8x128xf32>
    tpu.vector_store %arg8[%c0_17, %c0_18], %29 {strides = array<i32>} : memref<8x128xf32, #tpu.memory_space<vmem>>, vector<8x128xf32>,
    return
  }
  func.func @transform_0(%arg0: i32) -> (i32, i32) {
    %c0_i32 = arith.constant 0 : i32
    %c0_i32_0 = arith.constant 0 : i32
    return %arg0, %c0_i32 : i32, i32
  }
  func.func @transform_1(%arg0: i32) -> (i32, i32) {
    %c0_i32 = arith.constant 0 : i32
    %c0_i32_0 = arith.constant 0 : i32
    %c0_i32_1 = arith.constant 0 : i32
    return %c0_i32, %c0_i32_0 : i32, i32
  }
  func.func @transform_2(%arg0: i32) -> (i32, i32) {
    %c0_i32 = arith.constant 0 : i32
    %c0_i32_0 = arith.constant 0 : i32
    %c0_i32_1 = arith.constant 0 : i32
    return %c0_i32, %c0_i32_0 : i32, i32
  }
  func.func @transform_3(%arg0: i32) -> (i32, i32) {
    %c0_i32 = arith.constant 0 : i32
    %c0_i32_0 = arith.constant 0 : i32
    %c0_i32_1 = arith.constant 0 : i32
    return %c0_i32, %c0_i32_0 : i32, i32
  }
  func.func @transform_4(%arg0: i32) -> (i32, i32) {
    %c0_i32 = arith.constant 0 : i32
    %c0_i32_0 = arith.constant 0 : i32
    %c0_i32_1 = arith.constant 0 : i32
    return %c0_i32, %c0_i32_0 : i32, i32
  }
  func.func @transform_5(%arg0: i32) -> (i32, i32) {
    %c0_i32 = arith.constant 0 : i32
    %c0_i32_0 = arith.constant 0 : i32
    %c0_i32_1 = arith.constant 0 : i32
    return %c0_i32, %c0_i32_0 : i32, i32
  }
  func.func @transform_6(%arg0: i32) -> (i32, i32) {
    %c0_i32 = arith.constant 0 : i32
    %c0_i32_0 = arith.constant 0 : i32
    %c0_i32_1 = arith.constant 0 : i32
    return %c0_i32, %c0_i32_0 : i32, i32
  }
  func.func @transform_7(%arg0: i32) -> (i32, i32) {
    %c0_i32 = arith.constant 0 : i32
    %c0_i32_0 = arith.constant 0 : i32
    return %arg0, %c0_i32 : i32, i32
  }
}

</mosaic_0001>

<llo_original>
// kernel: tpu_custom_call.1
$region0: #{tpu_custom_call.1}
  #allocation0 [shape = 'u32[]', space=smem, size = 0x4, offset = 0x4, fixed_abs, tag = 'smem constant byte address 0x4 - core index']
  #allocation1 [shape = 'u32[144,128]{1,0:T(1,128)}', space=vmem, size = 0x12000, scoped, tag = 'internal scratch']
  %s0 = inlined_call_operand.hbm [shape: bf16[16,128], index: 0, kind: input, shape index: {}]
  %s1 = inlined_call_operand.hbm [shape: bf16[128,128], index: 1, kind: input, shape index: {}]
  %s2 = inlined_call_operand.vmem [shape: f32[1,128], index: 2, kind: input, shape index: {}]
  %s3 = inlined_call_operand.hbm [shape: bf16[128,128], index: 3, kind: input, shape index: {}]
  %s4 = inlined_call_operand.vmem [shape: f32[1,128], index: 4, kind: input, shape index: {}]
  %s5 = inlined_call_operand.hbm [shape: bf16[128,128], index: 5, kind: input, shape index: {}]
  %s6 = inlined_call_operand.vmem [shape: f32[1,128], index: 6, kind: input, shape index: {}]
  %s7 = inlined_call_operand.hbm [shape: f32[16,128], index: 7, kind: output, shape index: {}]
  %s8 = sld [smem:[#allocation0]]
  $region77: #{tpu_custom_call.1} parent=0
    _
  %s10 = ssub.s32 1, %s8
  %s11 = scalar_select 0, %s10, %s8
  $region1: #{tpu_custom_call.1} parent=0
    #allocation2 [shape = 'u8[4096]{0}', space=vmem, size = 0x1000, scoped, tag = 'input window, operand 0']
    #allocation3 [shape = 's32[2]{0}', space=sflag, size = 0x8, scoped, tag = 'scoped memory for tpu_custom_call.1']
    #allocation4 [shape = 's32[2]{0}', space=sflag, size = 0x8, scoped, tag = 'scoped memory for tpu_custom_call.1']
    #allocation5 [shape = 'u8[32768]{0}', space=vmem, size = 0x8000, scoped, tag = 'input window, operand 1, single buffered']
    #allocation6 [shape = 's32[1]{0}', space=sflag, size = 0x4, scoped, tag = 'scoped memory for tpu_custom_call.1']
    #allocation7 [shape = 'u8[32768]{0}', space=vmem, size = 0x8000, scoped, tag = 'input window, operand 3, single buffered']
    #allocation8 [shape = 'u8[32768]{0}', space=vmem, size = 0x8000, scoped, tag = 'input window, operand 5, single buffered']
    #allocation9 [shape = 's32[1]{0}', space=sflag, size = 0x4, scoped, tag = 'scoped memory for tpu_custom_call.1']
    #allocation10 [shape = 'u8[8192]{0}', space=vmem, size = 0x2000, scoped, tag = 'output window, operand 0']
    %12 = vsyncpa [#allocation3], 0
    %s13 = scalar_lea.sflag [#allocation3], 1
    %14 = vsyncpa %s13, 0
    %15 = vsyncpa [#allocation6], 0
    %16 = vsyncpa [#allocation9], 0
    %17 = vsyncpa [#allocation4], 0
    %s18 = scalar_lea.sflag [#allocation4], 1
    %19 = vsyncpa %s18, 0
    loop: start=0, step=1, limit=4
    $region2: #{tpu_custom_call.1} parent=1 // loop_pre_header
      _
    $region3: #{tpu_custom_call.1} parent=1 // loop_header
      %s21 = sphi 0, %s25
      %p22 = scmp.ge.s32.totalorder %s21, 4
      %s31 = sphi 0, %s33
      %s34 = sphi 0, %s31
      %s35 = sphi 0, %s34
      %s51 = sphi 0, %s35
      %s55 = sphi 0, %s55
      %s57 = sphi 0, %s55
      %s58 = sphi 0, %s57
      %s72 = sphi 0, %s58
      %s76 = sphi 0, %s76
      %s78 = sphi 0, %s76
      %s79 = sphi 0, %s78
      %s93 = sphi 0, %s79
      %s97 = sphi 0, %s97
      %s99 = sphi 0, %s97
      %s100 = sphi 0, %s99
      %s114 = sphi 0, %s100
      %s118 = sphi 0, %s118
      %s120 = sphi 0, %s118
      %s121 = sphi 0, %s120
      %s135 = sphi 0, %s121
      %s139 = sphi 0, %s139
      %s141 = sphi 0, %s139
      %s142 = sphi 0, %s141
      %s156 = sphi 0, %s142
      %s160 = sphi 0, %s160
      %s162 = sphi 0, %s160
      %s163 = sphi 0, %s162
      %s177 = sphi 0, %s163
      %s183 = sphi 0, %s185
      %s186 = sphi 0, %s183
      %s187 = sphi 0, %s186
      %s203 = sphi 0, %s187
    $region4: #{tpu_custom_call.1} parent=1 // loop_header_branch
      %24 = sbr.rel (%p22) target = $region8
    $region5: #{tpu_custom_call.1} parent=1 // loop_body
      %s26 = ssub.s32 %s21, 1
      %s27 = ssub.s32 %s21, 2
      %s28 = sadd.s32 %s21, 1
      %s29 = ssub.s32 %s21, %s28
      %p30 = scmp.eq.s32.totalorder %s29, 0
      %s32 = sadd.s32 %s31, 1
      %s33 = scalar_select %p30, %s31, %s32
      %p36 = pneg %p30
      %p37 = scmp.eq.s32.totalorder %s21, 1
      %p38 = por %p36, %p37
      %p39 = scmp.ne.s32.totalorder %s31, %s34
      %p40 = scmp.eq.s32.totalorder %s21, 0
      %p41 = por %p39, %p40
      %p42 = scmp.ne.s32.totalorder %s31, %s34
      %p43 = scmp.eq.s32.totalorder %s26, 1
      %p44 = por %p42, %p43
      %p45 = scmp.ne.s32.totalorder %s34, %s35
      %p46 = scmp.eq.s32.totalorder %s26, 0
      %p47 = por %p45, %p46
      %p48 = scmp.ne.s32.totalorder %s34, %s35
      %p49 = scmp.eq.s32.totalorder %s27, 1
      %p50 = por %p48, %p49
      %p52 = scmp.ne.s32.totalorder %s35, %s51
      %p53 = scmp.eq.s32.totalorder %s27, 0
      %p54 = por %p52, %p53
      %s56 = sadd.s32 %s55, 1
      %p59 = scmp.eq.s32.totalorder %s21, 1
      %p60 = scmp.ne.s32.totalorder %s55, %s57
      %p61 = scmp.eq.s32.totalorder %s21, 0
      %p62 = por %p60, %p61
      %p63 = scmp.ne.s32.totalorder %s55, %s57
      %p64 = scmp.eq.s32.totalorder %s26, 1
      %p65 = por %p63, %p64
      %p66 = scmp.ne.s32.totalorder %s57, %s58
      %p67 = scmp.eq.s32.totalorder %s26, 0
      %p68 = por %p66, %p67
      %p69 = scmp.ne.s32.totalorder %s57, %s58
      %p70 = scmp.eq.s32.totalorder %s27, 1
      %p71 = por %p69, %p70
      %p73 = scmp.ne.s32.totalorder %s58, %s72
      %p74 = scmp.eq.s32.totalorder %s27, 0
      %p75 = por %p73, %p74
      %s77 = sadd.s32 %s76, 1
      %p80 = scmp.eq.s32.totalorder %s21, 1
      %p81 = scmp.ne.s32.totalorder %s76, %s78
      %p82 = scmp.eq.s32.totalorder %s21, 0
      %p83 = por %p81, %p82
      %p84 = scmp.ne.s32.totalorder %s76, %s78
      %p85 = scmp.eq.s32.totalorder %s26, 1
      %p86 = por %p84, %p85
      %p87 = scmp.ne.s32.totalorder %s78, %s79
      %p88 = scmp.eq.s32.totalorder %s26, 0
      %p89 = por %p87, %p88
      %p90 = scmp.ne.s32.totalorder %s78, %s79
      %p91 = scmp.eq.s32.totalorder %s27, 1
      %p92 = por %p90, %p91
      %p94 = scmp.ne.s32.totalorder %s79, %s93
      %p95 = scmp.eq.s32.totalorder %s27, 0
      %p96 = por %p94, %p95
      %s98 = sadd.s32 %s97, 1
      %p101 = scmp.eq.s32.totalorder %s21, 1
      %p102 = scmp.ne.s32.totalorder %s97, %s99
      %p103 = scmp.eq.s32.totalorder %s21, 0
      %p104 = por %p102, %p103
      %p105 = scmp.ne.s32.totalorder %s97, %s99
      %p106 = scmp.eq.s32.totalorder %s26, 1
      %p107 = por %p105, %p106
      %p108 = scmp.ne.s32.totalorder %s99, %s100
      %p109 = scmp.eq.s32.totalorder %s26, 0
      %p110 = por %p108, %p109
      %p111 = scmp.ne.s32.totalorder %s99, %s100
      %p112 = scmp.eq.s32.totalorder %s27, 1
      %p113 = por %p111, %p112
      %p115 = scmp.ne.s32.totalorder %s100, %s114
      %p116 = scmp.eq.s32.totalorder %s27, 0
      %p117 = por %p115, %p116
      %s119 = sadd.s32 %s118, 1
      %p122 = scmp.eq.s32.totalorder %s21, 1
      %p123 = scmp.ne.s32.totalorder %s118, %s120
      %p124 = scmp.eq.s32.totalorder %s21, 0
      %p125 = por %p123, %p124
      %p126 = scmp.ne.s32.totalorder %s118, %s120
      %p127 = scmp.eq.s32.totalorder %s26, 1
      %p128 = por %p126, %p127
      %p129 = scmp.ne.s32.totalorder %s120, %s121
      %p130 = scmp.eq.s32.totalorder %s26, 0
      %p131 = por %p129, %p130
      %p132 = scmp.ne.s32.totalorder %s120, %s121
      %p133 = scmp.eq.s32.totalorder %s27, 1
      %p134 = por %p132, %p133
      %p136 = scmp.ne.s32.totalorder %s121, %s135
      %p137 = scmp.eq.s32.totalorder %s27, 0
      %p138 = por %p136, %p137
      %s140 = sadd.s32 %s139, 1
      %p143 = scmp.eq.s32.totalorder %s21, 1
      %p144 = scmp.ne.s32.totalorder %s139, %s141
      %p145 = scmp.eq.s32.totalorder %s21, 0
      %p146 = por %p144, %p145
      %p147 = scmp.ne.s32.totalorder %s139, %s141
      %p148 = scmp.eq.s32.totalorder %s26, 1
      %p149 = por %p147, %p148
      %p150 = scmp.ne.s32.totalorder %s141, %s142
      %p151 = scmp.eq.s32.totalorder %s26, 0
      %p152 = por %p150, %p151
      %p153 = scmp.ne.s32.totalorder %s141, %s142
      %p154 = scmp.eq.s32.totalorder %s27, 1
      %p155 = por %p153, %p154
      %p157 = scmp.ne.s32.totalorder %s142, %s156
      %p158 = scmp.eq.s32.totalorder %s27, 0
      %p159 = por %p157, %p158
      %s161 = sadd.s32 %s160, 1
      %p164 = scmp.eq.s32.totalorder %s21, 1
      %p165 = scmp.ne.s32.totalorder %s160, %s162
      %p166 = scmp.eq.s32.totalorder %s21, 0
      %p167 = por %p165, %p166
      %p168 = scmp.ne.s32.totalorder %s160, %s162
      %p169 = scmp.eq.s32.totalorder %s26, 1
      %p170 = por %p168, %p169
      %p171 = scmp.ne.s32.totalorder %s162, %s163
      %p172 = scmp.eq.s32.totalorder %s26, 0
      %p173 = por %p171, %p172
      %p174 = scmp.ne.s32.totalorder %s162, %s163
      %p175 = scmp.eq.s32.totalorder %s27, 1
      %p176 = por %p174, %p175
      %p178 = scmp.ne.s32.totalorder %s163, %s177
      %p179 = scmp.eq.s32.totalorder %s27, 0
      %p180 = por %p178, %p179
      %s181 = ssub.s32 %s21, %s28
      %p182 = scmp.eq.s32.totalorder %s181, 0
      %s184 = sadd.s32 %s183, 1
      %s185 = scalar_select %p182, %s183, %s184
      %p188 = pneg %p182
      %p189 = scmp.eq.s32.totalorder %s21, 1
      %p190 = por %p188, %p189
      %p191 = scmp.ne.s32.totalorder %s183, %s186
      %p192 = scmp.eq.s32.totalorder %s21, 0
      %p193 = por %p191, %p192
      %p194 = scmp.ne.s32.totalorder %s183, %s186
      %p195 = scmp.eq.s32.totalorder %s26, 1
      %p196 = por %p194, %p195
      %p197 = scmp.ne.s32.totalorder %s186, %s187
      %p198 = scmp.eq.s32.totalorder %s26, 0
      %p199 = por %p197, %p198
      %p200 = scmp.ne.s32.totalorder %s186, %s187
      %p201 = scmp.eq.s32.totalorder %s27, 1
      %p202 = por %p200, %p201
      %p204 = scmp.ne.s32.totalorder %s187, %s203
      %p205 = scmp.eq.s32.totalorder %s27, 0
      %p206 = por %p204, %p205
      %p207 = scmp.le.s32.totalorder 1, %s21
      %p208 = scmp.lt.s32.totalorder %s21, 3
      %p209 = pnand %p207, %p208
      %p210 = pneg %p209
      // Predicated region
      $region9: #{tpu_custom_call.1} parent=5 // pred_check
        _
      $region10: #{tpu_custom_call.1} parent=5 // pred_check_branch
        %212 = sbr.rel (%p209) target = $region12
      $region11: #{tpu_custom_call.1} parent=5 // pred_region
        %s213 = ssub.s32 %s21, 1
        // Predicated region
        $region13: #{tpu_custom_call.1} parent=11 // pred_check
          %p214 = pneg %p68
        $region14: #{tpu_custom_call.1} parent=11 // pred_check_branch
          %216 = sbr.rel (%p214) target = $region16
        $region15: #{tpu_custom_call.1} parent=11 // pred_region
          %s218 = ssub.s32 1024, 1024
          %219 = vsyncadd [#allocation6], %s218
          %s220 = sshll.u32 [#allocation5], 4
          %s221 = int_to_ptr.vmem [resolvable:$true] %s220
          %226 = dma.hbm_to_vmem [thread:$0]  %s1, 1024, %s221, [#allocation6], 64, 64, 4
        $region16: #{tpu_custom_call.1} parent=11 // pred_fallthru
          _
        // Predicated region
        $region17: #{tpu_custom_call.1} parent=11 // pred_check
          %p227 = pneg %p89
        $region18: #{tpu_custom_call.1} parent=11 // pred_check_branch
          %229 = sbr.rel (%p227) target = $region20
        $region19: #{tpu_custom_call.1} parent=11 // pred_region
          _
        $region20: #{tpu_custom_call.1} parent=11 // pred_fallthru
          _
        // Predicated region
        $region21: #{tpu_custom_call.1} parent=11 // pred_check
          %p230 = pneg %p110
        $region22: #{tpu_custom_call.1} parent=11 // pred_check_branch
          %232 = sbr.rel (%p230) target = $region24
        $region23: #{tpu_custom_call.1} parent=11 // pred_region
          %s234 = ssub.s32 1024, 1024
          %235 = vsyncadd [#allocation6], %s234
          %s236 = sshll.u32 [#allocation7], 4
          %s237 = int_to_ptr.vmem [resolvable:$true] %s236
          %242 = dma.hbm_to_vmem [thread:$0]  %s3, 1024, %s237, [#allocation6], 64, 64, 4
        $region24: #{tpu_custom_call.1} parent=11 // pred_fallthru
          _
        // Predicated region
        $region25: #{tpu_custom_call.1} parent=11 // pred_check
          %p243 = pneg %p131
        $region26: #{tpu_custom_call.1} parent=11 // pred_check_branch
          %245 = sbr.rel (%p243) target = $region28
        $region27: #{tpu_custom_call.1} parent=11 // pred_region
          _
        $region28: #{tpu_custom_call.1} parent=11 // pred_fallthru
          _
        // Predicated region
        $region29: #{tpu_custom_call.1} parent=11 // pred_check
          %p246 = pneg %p152
        $region30: #{tpu_custom_call.1} parent=11 // pred_check_branch
          %248 = sbr.rel (%p246) target = $region32
        $region31: #{tpu_custom_call.1} parent=11 // pred_region
          %s250 = ssub.s32 1024, 1024
          %251 = vsyncadd [#allocation9], %s250
          %s252 = sshll.u32 [#allocation8], 4
          %s253 = int_to_ptr.vmem [resolvable:$true] %s252
          %258 = dma.hbm_to_vmem [thread:$0]  %s5, 1024, %s253, [#allocation9], 64, 64, 4
        $region32: #{tpu_custom_call.1} parent=11 // pred_fallthru
          _
        // Predicated region
        $region33: #{tpu_custom_call.1} parent=11 // pred_check
          %p259 = pneg %p173
        $region34: #{tpu_custom_call.1} parent=11 // pred_check_branch
          %261 = sbr.rel (%p259) target = $region36
        $region35: #{tpu_custom_call.1} parent=11 // pred_region
          _
        $region36: #{tpu_custom_call.1} parent=11 // pred_fallthru
          _
      $region12: #{tpu_custom_call.1} parent=5 // pred_fallthru
        _
      %p262 = scmp.lt.s32.totalorder %s21, 2
      // Predicated region
      $region37: #{tpu_custom_call.1} parent=5 // pred_check
        %p263 = pneg %p262
      $region38: #{tpu_custom_call.1} parent=5 // pred_check_branch
        %265 = sbr.rel (%p263) target = $region40
      $region39: #{tpu_custom_call.1} parent=5 // pred_region
        // Predicated region
        $region41: #{tpu_custom_call.1} parent=39 // pred_check
          %p266 = pneg %p41
        $region42: #{tpu_custom_call.1} parent=39 // pred_check_branch
          %268 = sbr.rel (%p266) target = $region44
        $region43: #{tpu_custom_call.1} parent=39 // pred_region
          %s269 = sand.u32 %s31, 1
          %s270 = scalar_lea.sflag [#allocation3], %s269
          %s271 = sand.u32 %s31, 1
          %s272 = smul.addr %s271, 4
          %s273 = scalar_lea.vmem [#allocation2], %s272
          %s275 = ssub.s32 64, 64
          %276 = vsyncadd %s270, %s275
          %s277 = smul.addr %s21, 64
          %s278 = scalar_lea.hbm %s0, %s277
          %s280 = sshll.u32 %s273, 4
          %s281 = int_to_ptr.vmem [resolvable:$true] %s280
          %283 = dma.hbm_to_vmem [thread:$0]  %s278, 64, %s281, %s270
        $region44: #{tpu_custom_call.1} parent=39 // pred_fallthru
          _
      $region40: #{tpu_custom_call.1} parent=5 // pred_fallthru
        _
      %p284 = scmp.le.s32.totalorder 1, %s21
      %p285 = scmp.lt.s32.totalorder %s21, 3
      %p286 = pnand %p284, %p285
      %p287 = pneg %p286
      // Predicated region
      $region45: #{tpu_custom_call.1} parent=5 // pred_check
        _
      $region46: #{tpu_custom_call.1} parent=5 // pred_check_branch
        %289 = sbr.rel (%p286) target = $region48
      $region47: #{tpu_custom_call.1} parent=5 // pred_region
        %s290 = ssub.s32 %s21, 1
        %s291 = sand.u32 %s34, 1
        %s292 = scalar_lea.sflag [#allocation3], %s291
        %s293 = sand.u32 %s34, 1
        %s294 = smul.addr %s293, 4
        %s295 = scalar_lea.vmem [#allocation2], %s294
        // Predicated region
        $region49: #{tpu_custom_call.1} parent=47 // pred_check
          %p296 = pneg %p47
        $region50: #{tpu_custom_call.1} parent=47 // pred_check_branch
          %298 = sbr.rel (%p296) target = $region52
        $region51: #{tpu_custom_call.1} parent=47 // pred_region
          %299 = dma.done %s292, 64
        $region52: #{tpu_custom_call.1} parent=47 // pred_fallthru
          _
        // Predicated region
        $region53: #{tpu_custom_call.1} parent=47 // pred_check
          %p300 = pneg %p68
        $region54: #{tpu_custom_call.1} parent=47 // pred_check_branch
          %302 = sbr.rel (%p300) target = $region56
        $region55: #{tpu_custom_call.1} parent=47 // pred_region
          %303 = dma.done [#allocation6], 1024
        $region56: #{tpu_custom_call.1} parent=47 // pred_fallthru
          _
        // Predicated region
        $region57: #{tpu_custom_call.1} parent=47 // pred_check
          %p304 = pneg %p110
        $region58: #{tpu_custom_call.1} parent=47 // pred_check_branch
          %306 = sbr.rel (%p304) target = $region60
        $region59: #{tpu_custom_call.1} parent=47 // pred_region
          %307 = dma.done [#allocation6], 1024
        $region60: #{tpu_custom_call.1} parent=47 // pred_fallthru
          _
        // Predicated region
        $region61: #{tpu_custom_call.1} parent=47 // pred_check
          %p308 = pneg %p152
        $region62: #{tpu_custom_call.1} parent=47 // pred_check_branch
          %310 = sbr.rel (%p308) target = $region64
        $region63: #{tpu_custom_call.1} parent=47 // pred_region
          %311 = dma.done [#allocation9], 1024
        $region64: #{tpu_custom_call.1} parent=47 // pred_fallthru
          _
        %s312 = sand.u32 %s34, 1
        %s313 = scalar_lea.sflag [#allocation3], %s312
        %s314 = sand.u32 %s34, 1
        %s315 = smul.addr %s314, 4
        %s316 = scalar_lea.vmem [#allocation2], %s315
        %p317 = pneg %p47
        %p318 = pneg %p44
        %p319 = pneg %p68
        %p320 = pneg %p65
        %p321 = pneg %p89
        %p322 = pneg %p86
        %p323 = pneg %p110
        %p324 = pneg %p107
        %p325 = pneg %p131
        %p326 = pneg %p128
        %p327 = pneg %p152
        %p328 = pneg %p149
        %p329 = pneg %p173
        %p330 = pneg %p170
        %p331 = pneg %p199
        %p332 = pneg %p196
        %s333 = sand.u32 %s186, 1
        %s334 = scalar_lea.sflag [#allocation4], %s333
        %s335 = sand.u32 %s186, 1
        %s336 = smul.addr %s335, 8
        %s337 = scalar_lea.vmem [#allocation10], %s336
        %v339 = vld [vmem:[%s295] sm:$0xf]
        %v340 = vld [vmem:[#allocation5] sm:$0xf]
        %v341 = vld [vmem:[#allocation5 + $0x4] sm:$0xf]
        %v342 = vld [vmem:[#allocation5 + $0x8] sm:$0xf]
        %v343 = vld [vmem:[#allocation5 + $0xc] sm:$0xf]
        %v344 = vld [vmem:[#allocation5 + $0x10] sm:$0xf]
        %v345 = vld [vmem:[#allocation5 + $0x14] sm:$0xf]
        %v346 = vld [vmem:[#allocation5 + $0x18] sm:$0xf]
        %v347 = vld [vmem:[#allocation5 + $0x1c] sm:$0xf]
        %v348 = vld [vmem:[#allocation5 + $0x20] sm:$0xf]
        %v349 = vld [vmem:[#allocation5 + $0x24] sm:$0xf]
        %v350 = vld [vmem:[#allocation5 + $0x28] sm:$0xf]
        %v351 = vld [vmem:[#allocation5 + $0x2c] sm:$0xf]
        %v352 = vld [vmem:[#allocation5 + $0x30] sm:$0xf]
        %v353 = vld [vmem:[#allocation5 + $0x34] sm:$0xf]
        %v354 = vld [vmem:[#allocation5 + $0x38] sm:$0xf]
        %v355 = vld [vmem:[#allocation5 + $0x3c] sm:$0xf]
        %v356 = vld [vmem:[%s2] sm:$0x1]
        %v358 = vlaneseq
        %v359 = vshrl.u32 %v358, 7
        %v360 = vsub.s32 0, %v359
        %v361 = vrot.slane %v356, %v360
        %v379 = vunpack.c.l.b16 %v340
        %v380 = vunpack.c.l.b16 %v341
        %v381 = vunpack.c.l.b16 %v342
        %v382 = vunpack.c.l.b16 %v343
        %v383 = vunpack.c.l.b16 %v344
        %v384 = vunpack.c.l.b16 %v345
        %v385 = vunpack.c.l.b16 %v346
        %v386 = vunpack.c.l.b16 %v347
        %v387 = vunpack.c.l.b16 %v348
        %v388 = vunpack.c.l.b16 %v349
        %v389 = vunpack.c.l.b16 %v350
        %v390 = vunpack.c.l.b16 %v351
        %v391 = vunpack.c.l.b16 %v352
        %v392 = vunpack.c.l.b16 %v353
        %v393 = vunpack.c.l.b16 %v354
        %v394 = vunpack.c.l.b16 %v355
        %v395 = vpack.c.b16 %v380, %v379
        %v396 = vpack.c.b16 %v382, %v381
        %v397 = vpack.c.b16 %v384, %v383
        %v398 = vpack.c.b16 %v386, %v385
        %v399 = vpack.c.b16 %v388, %v387
        %v400 = vpack.c.b16 %v390, %v389
        %v401 = vpack.c.b16 %v392, %v391
        %v402 = vpack.c.b16 %v394, %v393
        %411 = vmatprep.subr.bf16.mxu0 0
        %412 = vmatpush1.bf16.msra.mxu0 %v395
        %413 = vmatprep.subr.bf16.mxu0 0
        %414 = vmatpush1.bf16.msra.mxu0 %v396
        %415 = vmatprep.subr.bf16.mxu0 0
        %416 = vmatpush1.bf16.msra.mxu0 %v397
        %417 = vmatprep.subr.bf16.mxu0 0
        %418 = vmatpush1.bf16.msra.mxu0 %v398
        %419 = vmatprep.subr.bf16.mxu0 0
        %420 = vmatpush1.bf16.msra.mxu0 %v399
        %421 = vmatprep.subr.bf16.mxu0 0
        %422 = vmatpush1.bf16.msra.mxu0 %v400
        %423 = vmatprep.subr.bf16.mxu0 0
        %424 = vmatpush1.bf16.msra.mxu0 %v401
        %425 = vmatprep.subr.bf16.mxu0 0
        %426 = vmatpush1.bf16.msra.mxu0 %v402
        %427 = vmatprep.subr.bf16.mxu0 0
        %428 = vmatpush1.bf16.msra.mxu0 0
        %429 = vmatprep.subr.bf16.mxu0 0
        %430 = vmatpush1.bf16.msra.mxu0 0
        %431 = vmatprep.subr.bf16.mxu0 0
        %432 = vmatpush1.bf16.msra.mxu0 0
        %433 = vmatprep.subr.bf16.mxu0 0
        %434 = vmatpush1.bf16.msra.mxu0 0
        %435 = vmatprep.subr.bf16.mxu0 0
        %436 = vmatpush1.bf16.msra.mxu0 0
        %437 = vmatprep.subr.bf16.mxu0 0
        %438 = vmatpush1.bf16.msra.mxu0 0
        %439 = vmatprep.subr.bf16.mxu0 0
        %440 = vmatpush1.bf16.msra.mxu0 0
        %441 = vmatprep.subr.bf16.mxu0 0
        %442 = vmatpush1.bf16.msra.mxu0 0
        %443 = vmatprep.mubr.bf16.mxu0 0
        %444 = vmatmul.mubr.bf16.gmra.mrb[0].mxu0 %v339
        %v445 = vpop.f32.mrb[0].mxu0
        %v446 = vadd.f32 %v361, %v445
        %v447 = vpop.f32.mrb[0].mxu0
        %v448 = vpop.f32.mrb[0].mxu0
        %v449 = vpop.f32.mrb[0].mxu0
        %450 = vdwg.mxu0
        %v451 = vxor.u32 %v446, 2147483648
        %v452 = vmul.f32 %v451, 1.442695
        %v453 = vpow.pop %v452
        %v454 = vadd.f32 %v453, 1.0
        %v455 = vrcp.pop %v454
        %v456 = vmul.f32 1.0, %v455
        %v457 = vmul.f32 %v446, %v456
        %v458 = vpack.c.bf16 %v457, %v457
        %v459 = vld [vmem:[#allocation7] sm:$0xf]
        %v460 = vld [vmem:[#allocation7 + $0x4] sm:$0xf]
        %v461 = vld [vmem:[#allocation7 + $0x8] sm:$0xf]
        %v462 = vld [vmem:[#allocation7 + $0xc] sm:$0xf]
        %v463 = vld [vmem:[#allocation7 + $0x10] sm:$0xf]
        %v464 = vld [vmem:[#allocation7 + $0x14] sm:$0xf]
        %v465 = vld [vmem:[#allocation7 + $0x18] sm:$0xf]
        %v466 = vld [vmem:[#allocation7 + $0x1c] sm:$0xf]
        %v467 = vld [vmem:[#allocation7 + $0x20] sm:$0xf]
        %v468 = vld [vmem:[#allocation7 + $0x24] sm:$0xf]
        %v469 = vld [vmem:[#allocation7 + $0x28] sm:$0xf]
        %v470 = vld [vmem:[#allocation7 + $0x2c] sm:$0xf]
        %v471 = vld [vmem:[#allocation7 + $0x30] sm:$0xf]
        %v472 = vld [vmem:[#allocation7 + $0x34] sm:$0xf]
        %v473 = vld [vmem:[#allocation7 + $0x38] sm:$0xf]
        %v474 = vld [vmem:[#allocation7 + $0x3c] sm:$0xf]
        %v475 = vld [vmem:[%s4] sm:$0x1]
        %v477 = vlaneseq
        %v478 = vshrl.u32 %v477, 7
        %v479 = vsub.s32 0, %v478
        %v480 = vrot.slane %v475, %v479
        %v498 = vunpack.c.l.b16 %v459
        %v499 = vunpack.c.l.b16 %v460
        %v500 = vunpack.c.l.b16 %v461
        %v501 = vunpack.c.l.b16 %v462
        %v502 = vunpack.c.l.b16 %v463
        %v503 = vunpack.c.l.b16 %v464
        %v504 = vunpack.c.l.b16 %v465
        %v505 = vunpack.c.l.b16 %v466
        %v506 = vunpack.c.l.b16 %v467
        %v507 = vunpack.c.l.b16 %v468
        %v508 = vunpack.c.l.b16 %v469
        %v509 = vunpack.c.l.b16 %v470
        %v510 = vunpack.c.l.b16 %v471
        %v511 = vunpack.c.l.b16 %v472
        %v512 = vunpack.c.l.b16 %v473
        %v513 = vunpack.c.l.b16 %v474
        %v514 = vpack.c.b16 %v499, %v498
        %v515 = vpack.c.b16 %v501, %v500
        %v516 = vpack.c.b16 %v503, %v502
        %v517 = vpack.c.b16 %v505, %v504
        %v518 = vpack.c.b16 %v507, %v506
        %v519 = vpack.c.b16 %v509, %v508
        %v520 = vpack.c.b16 %v511, %v510
        %v521 = vpack.c.b16 %v513, %v512
        %530 = vmatprep.subr.bf16.mxu0 0
        %531 = vmatpush1.bf16.msra.mxu0 %v514
        %532 = vmatprep.subr.bf16.mxu0 0
        %533 = vmatpush1.bf16.msra.mxu0 %v515
        %534 = vmatprep.subr.bf16.mxu0 0
        %535 = vmatpush1.bf16.msra.mxu0 %v516
        %536 = vmatprep.subr.bf16.mxu0 0
        %537 = vmatpush1.bf16.msra.mxu0 %v517
        %538 = vmatprep.subr.bf16.mxu0 0
        %539 = vmatpush1.bf16.msra.mxu0 %v518
        %540 = vmatprep.subr.bf16.mxu0 0
        %541 = vmatpush1.bf16.msra.mxu0 %v519
        %542 = vmatprep.subr.bf16.mxu0 0
        %543 = vmatpush1.bf16.msra.mxu0 %v520
        %544 = vmatprep.subr.bf16.mxu0 0
        %545 = vmatpush1.bf16.msra.mxu0 %v521
        %546 = vmatprep.subr.bf16.mxu0 0
        %547 = vmatpush1.bf16.msra.mxu0 0
        %548 = vmatprep.subr.bf16.mxu0 0
        %549 = vmatpush1.bf16.msra.mxu0 0
        %550 = vmatprep.subr.bf16.mxu0 0
        %551 = vmatpush1.bf16.msra.mxu0 0
        %552 = vmatprep.subr.bf16.mxu0 0
        %553 = vmatpush1.bf16.msra.mxu0 0
        %554 = vmatprep.subr.bf16.mxu0 0
        %555 = vmatpush1.bf16.msra.mxu0 0
        %556 = vmatprep.subr.bf16.mxu0 0
        %557 = vmatpush1.bf16.msra.mxu0 0
        %558 = vmatprep.subr.bf16.mxu0 0
        %559 = vmatpush1.bf16.msra.mxu0 0
        %560 = vmatprep.subr.bf16.mxu0 0
        %561 = vmatpush1.bf16.msra.mxu0 0
        %562 = vmatprep.mubr.bf16.mxu0 0
        %563 = vmatmul.mubr.bf16.gmra.mrb[0].mxu0 %v458
        %v564 = vpop.f32.mrb[0].mxu0
        %v565 = vadd.f32 %v480, %v564
        %v566 = vpop.f32.mrb[0].mxu0
        %v567 = vpop.f32.mrb[0].mxu0
        %v568 = vpop.f32.mrb[0].mxu0
        %569 = vdwg.mxu0
        %v570 = vxor.u32 %v565, 2147483648
        %v571 = vmul.f32 %v570, 1.442695
        %v572 = vpow.pop %v571
        %v573 = vadd.f32 %v572, 1.0
        %v574 = vrcp.pop %v573
        %v575 = vmul.f32 1.0, %v574
        %v576 = vmul.f32 %v565, %v575
        %v577 = vpack.c.bf16 %v576, %v576
        %v578 = vld [vmem:[#allocation8] sm:$0xf]
        %v579 = vld [vmem:[#allocation8 + $0x4] sm:$0xf]
        %v580 = vld [vmem:[#allocation8 + $0x8] sm:$0xf]
        %v581 = vld [vmem:[#allocation8 + $0xc] sm:$0xf]
        %v582 = vld [vmem:[#allocation8 + $0x10] sm:$0xf]
        %v583 = vld [vmem:[#allocation8 + $0x14] sm:$0xf]
        %v584 = vld [vmem:[#allocation8 + $0x18] sm:$0xf]
        %v585 = vld [vmem:[#allocation8 + $0x1c] sm:$0xf]
        %v586 = vld [vmem:[#allocation8 + $0x20] sm:$0xf]
        %v587 = vld [vmem:[#allocation8 + $0x24] sm:$0xf]
        %v588 = vld [vmem:[#allocation8 + $0x28] sm:$0xf]
        %v589 = vld [vmem:[#allocation8 + $0x2c] sm:$0xf]
        %v590 = vld [vmem:[#allocation8 + $0x30] sm:$0xf]
        %v591 = vld [vmem:[#allocation8 + $0x34] sm:$0xf]
        %v592 = vld [vmem:[#allocation8 + $0x38] sm:$0xf]
        %v593 = vld [vmem:[#allocation8 + $0x3c] sm:$0xf]
        %v594 = vld [vmem:[%s6] sm:$0x1]
        %v596 = vlaneseq
        %v597 = vshrl.u32 %v596, 7
        %v598 = vsub.s32 0, %v597
        %v599 = vrot.slane %v594, %v598
        %v617 = vunpack.c.l.b16 %v578
        %v618 = vunpack.c.l.b16 %v579
        %v619 = vunpack.c.l.b16 %v580
        %v620 = vunpack.c.l.b16 %v581
        %v621 = vunpack.c.l.b16 %v582
        %v622 = vunpack.c.l.b16 %v583
        %v623 = vunpack.c.l.b16 %v584
        %v624 = vunpack.c.l.b16 %v585
        %v625 = vunpack.c.l.b16 %v586
        %v626 = vunpack.c.l.b16 %v587
        %v627 = vunpack.c.l.b16 %v588
        %v628 = vunpack.c.l.b16 %v589
        %v629 = vunpack.c.l.b16 %v590
        %v630 = vunpack.c.l.b16 %v591
        %v631 = vunpack.c.l.b16 %v592
        %v632 = vunpack.c.l.b16 %v593
        %v633 = vpack.c.b16 %v618, %v617
        %v634 = vpack.c.b16 %v620, %v619
        %v635 = vpack.c.b16 %v622, %v621
        %v636 = vpack.c.b16 %v624, %v623
        %v637 = vpack.c.b16 %v626, %v625
        %v638 = vpack.c.b16 %v628, %v627
        %v639 = vpack.c.b16 %v630, %v629
        %v640 = vpack.c.b16 %v632, %v631
        %649 = vmatprep.subr.bf16.mxu0 0
        %650 = vmatpush1.bf16.msra.mxu0 %v633
        %651 = vmatprep.subr.bf16.mxu0 0
        %652 = vmatpush1.bf16.msra.mxu0 %v634
        %653 = vmatprep.subr.bf16.mxu0 0
        %654 = vmatpush1.bf16.msra.mxu0 %v635
        %655 = vmatprep.subr.bf16.mxu0 0
        %656 = vmatpush1.bf16.msra.mxu0 %v636
        %657 = vmatprep.subr.bf16.mxu0 0
        %658 = vmatpush1.bf16.msra.mxu0 %v637
        %659 = vmatprep.subr.bf16.mxu0 0
        %660 = vmatpush1.bf16.msra.mxu0 %v638
        %661 = vmatprep.subr.bf16.mxu0 0
        %662 = vmatpush1.bf16.msra.mxu0 %v639
        %663 = vmatprep.subr.bf16.mxu0 0
        %664 = vmatpush1.bf16.msra.mxu0 %v640
        %665 = vmatprep.subr.bf16.mxu0 0
        %666 = vmatpush1.bf16.msra.mxu0 0
        %667 = vmatprep.subr.bf16.mxu0 0
        %668 = vmatpush1.bf16.msra.mxu0 0
        %669 = vmatprep.subr.bf16.mxu0 0
        %670 = vmatpush1.bf16.msra.mxu0 0
        %671 = vmatprep.subr.bf16.mxu0 0
        %672 = vmatpush1.bf16.msra.mxu0 0
        %673 = vmatprep.subr.bf16.mxu0 0
        %674 = vmatpush1.bf16.msra.mxu0 0
        %675 = vmatprep.subr.bf16.mxu0 0
        %676 = vmatpush1.bf16.msra.mxu0 0
        %677 = vmatprep.subr.bf16.mxu0 0
        %678 = vmatpush1.bf16.msra.mxu0 0
        %679 = vmatprep.subr.bf16.mxu0 0
        %680 = vmatpush1.bf16.msra.mxu0 0
        %681 = vmatprep.mubr.bf16.mxu0 0
        %682 = vmatmul.mubr.bf16.gmra.mrb[0].mxu0 %v577
        %v683 = vpop.f32.mrb[0].mxu0
        %v684 = vadd.f32 %v599, %v683
        %v685 = vpop.f32.mrb[0].mxu0
        %v686 = vpop.f32.mrb[0].mxu0
        %v687 = vpop.f32.mrb[0].mxu0
        %688 = vdwg.mxu0
        %689 = vst [vmem:[%s337] sm:$0xff] %v684
        %s690 = sand.u32 %s186, 1
        %s691 = scalar_lea.sflag [#allocation4], %s690
        %s692 = sand.u32 %s186, 1
        %s693 = smul.addr %s692, 8
        %s694 = scalar_lea.vmem [#allocation10], %s693
        // Predicated region
        $region65: #{tpu_custom_call.1} parent=47 // pred_check
          %p695 = pneg %p196
        $region66: #{tpu_custom_call.1} parent=47 // pred_check_branch
          %697 = sbr.rel (%p695) target = $region68
        $region67: #{tpu_custom_call.1} parent=47 // pred_region
          %s699 = ssub.s32 128, 128
          %700 = vsyncadd %s691, %s699
          %s701 = smul.addr %s26, 128
          %s702 = scalar_lea.hbm %s7, %s701
          %s704 = sshll.u32 %s694, 4
          %s705 = int_to_ptr.vmem [resolvable:$true] %s704
          %707 = dma.vmem_to_hbm [thread:$0]  %s705, 128, %s702, %s691
        $region68: #{tpu_custom_call.1} parent=47 // pred_fallthru
          _
      $region48: #{tpu_custom_call.1} parent=5 // pred_fallthru
        _
      %p708 = scmp.le.s32.totalorder 2, %s21
      // Predicated region
      $region69: #{tpu_custom_call.1} parent=5 // pred_check
        %p709 = pneg %p708
      $region70: #{tpu_custom_call.1} parent=5 // pred_check_branch
        %711 = sbr.rel (%p709) target = $region72
      $region71: #{tpu_custom_call.1} parent=5 // pred_region
        %s712 = ssub.s32 %s21, 2
        // Predicated region
        $region73: #{tpu_custom_call.1} parent=71 // pred_check
          %p713 = pneg %p202
        $region74: #{tpu_custom_call.1} parent=71 // pred_check_branch
          %715 = sbr.rel (%p713) target = $region76
        $region75: #{tpu_custom_call.1} parent=71 // pred_region
          %s716 = sand.u32 %s187, 1
          %s717 = scalar_lea.sflag [#allocation4], %s716
          %s718 = sand.u32 %s187, 1
          %s719 = smul.addr %s718, 8
          %s720 = scalar_lea.vmem [#allocation10], %s719
          %721 = dma.done %s717, 128
        $region76: #{tpu_custom_call.1} parent=71 // pred_fallthru
          _
      $region72: #{tpu_custom_call.1} parent=5 // pred_fallthru
        _
    $region6: #{tpu_custom_call.1} parent=1 // loop_footer
      %s25 = sadd.s32 1, %s21
    $region7: #{tpu_custom_call.1} parent=1 // loop_footer_branch
      %20 = sbr.rel target = $region3
    $region8: #{tpu_custom_call.1} parent=1 // loop_exit
      _
    %722 = vsyncpa [#allocation3], 1
    %s723 = scalar_lea.sflag [#allocation3], 1
    %724 = vsyncpa %s723, 1
    %725 = vsyncpa [#allocation6], 1
    %726 = vsyncpa [#allocation9], 1
    %727 = vsyncpa [#allocation4], 1
    %s728 = scalar_lea.sflag [#allocation4], 1
    %729 = vsyncpa %s728, 1

</llo_original>
